<compile_context>
chip_gen: v7x
topology: tpu7x:2x2x1
jax: 0.10.0
libtpu: 0.0.40
codegen_flags: <defaults>
</compile_context>

<pallas_src>
import numpy as np
import jax
import jax.numpy as jnp
from jax import lax
from jax.experimental import pallas as pl
from jax.experimental.pallas import tpu as pltpu

N = 2          # demo batch size
EPS = 1e-5     # BatchNorm eps

# --------------------------------------------------------------- packed layout
# Row offsets inside the single packed (R_TOTAL, 128) f32 parameter buffer.
# Every section starts at a multiple-of-8 row (sublane aligned) and at column 0
# (lane aligned), zero-padded out to 128 lanes so all in-kernel slices are
# cheap and all contractions after layer 1 are full 128 wide (extra rows/cols
# are zero, so they contribute nothing).
ROW_W1 = 0      # conv1 + bn1 folded with im2col : (162, 81)
ROW_B1 = 168    # (1, 81)
ROW_W2 = 176    # conv2 + bn2 folded             : (128, 108)  (81 live rows)
ROW_B2 = 304    # (1, 108)
ROW_W3 = 312    # conv3 (1x1)                    : (128, 4)    (108 live rows)
ROW_B3 = 440    # (1, 4)
ROW_M4 = 448    # convT4 (1->1, 8x8) dense map   : (128, 82)   (4 live rows;
                #   column 81 carries the folded fc2∘fc1 value-head weight)
ROW_B4 = 576    # (1, 82)                         (column 81 = folded fc bias)
ROW_W5 = 584    # convT5 weights, lane-broadcast : (9, 81)
ROW_B5 = 600    # convT5 biases,  lane-broadcast : (9, 81)
R_TOTAL = 616


# ----------------------------------------------------------------------- kernel
def sudoku_kernel(x_ref, pk_ref, pi_ref, v_ref):
    f32 = jnp.float32
    x = x_ref[...]                                                  # (TB, 162)

    # conv1 (2->9, 3x3, stride 3) + bn1 + relu  (im2col folded into the weight)
    h1 = jnp.dot(x, pk_ref[ROW_W1:ROW_W1 + 162, :],
                 preferred_element_type=f32) + pk_ref[ROW_B1:ROW_B1 + 1, :]
    h1 = jnp.maximum(h1, 0.0)                   # (TB, 128); cols >= 81 are 0

    # conv2 (9->27, 2x2) + bn2 + relu : single dense (81 -> 108) matmul
    h2 = jnp.dot(h1, pk_ref[ROW_W2:ROW_W2 + 128, :],
                 preferred_element_type=f32) + pk_ref[ROW_B2:ROW_B2 + 1, :]
    h2 = jnp.maximum(h2, 0.0)                   # (TB, 128); cols >= 108 are 0

    # conv3 (27->1, 1x1) + relu : dense (108 -> 4) matmul == state.view(-1, 4)
    h3 = jnp.dot(h2, pk_ref[ROW_W3:ROW_W3 + 128, :],
                 preferred_element_type=f32) + pk_ref[ROW_B3:ROW_B3 + 1, :]
    h3 = jnp.maximum(h3, 0.0)                   # (TB, 128); cols >= 4 are 0

    # conv4 (ConvTranspose2d(1,1,8)) as dense (4 -> 81), with the folded
    # fc2∘fc1 value head riding along in output column 81 (free MXU lanes).
    p_ext = jnp.dot(h3, pk_ref[ROW_M4:ROW_M4 + 128, :],
                    preferred_element_type=f32) + pk_ref[ROW_B4:ROW_B4 + 1, :]

    # value head: sigmoid(fc2(fc1(state.view(-1, 4)))) -- taken BEFORE the relu
    v_pre = p_ext[:, 81:82]                                         # (TB, 1)
    v_ref[...] = 1.0 / (1.0 + jnp.exp(-v_pre))

    p81 = jnp.maximum(p_ext[:, 0:81], 0.0)                          # (TB, 81)

    # conv5 (ConvTranspose2d(1,9,1)) + relu + log_softmax over channels,
    # unrolled as nine 2-D (TB, 81) tiles: no padded 3-D intermediate and no
    # cross-sublane reductions.  w5/b5 rows are pre-broadcast over lanes.
    logits = []
    m = None
    for c in range(9):
        w5c = pk_ref[ROW_W5 + c:ROW_W5 + c + 1, 0:81]               # (1, 81)
        b5c = pk_ref[ROW_B5 + c:ROW_B5 + c + 1, 0:81]               # (1, 81)
        lc = jnp.maximum(p81 * w5c + b5c, 0.0)                      # (TB, 81)
        logits.append(lc)
        m = lc if m is None else jnp.maximum(m, lc)
    s = None
    for c in range(9):
        e = jnp.exp(logits[c] - m)
        s = e if s is None else s + e
    lse = m + jnp.log(s)
    for c in range(9):
        pi_ref[c] = logits[c] - lse                                 # (TB, 81)


# ----------------------------------------------------------------- param setup
def init_params(key):
    ks = jax.random.split(key, 20)

    def rnd(k, shape, s=0.2):
        return (s * jax.random.normal(k, shape)).astype(jnp.float32)

    return dict(
        W1=rnd(ks[0], (9, 2, 3, 3)),   b1=rnd(ks[1], (9,)),
        W2=rnd(ks[2], (27, 9, 2, 2)),  b2=rnd(ks[3], (27,)),
        W3=rnd(ks[4], (1, 27, 1, 1)),  b3=rnd(ks[5], (1,)),
        W4=rnd(ks[6], (1, 1, 8, 8)),   b4=rnd(ks[7], (1,)),
        W5=rnd(ks[8], (1, 9, 1, 1)),   b5=rnd(ks[9], (9,)),
        g1=(1.0 + rnd(ks[10], (9,), 0.05)).astype(jnp.float32),
        be1=rnd(ks[11], (9,), 0.05),
        g2=(1.0 + rnd(ks[12], (27,), 0.05)).astype(jnp.float32),
        be2=rnd(ks[13], (27,), 0.05),
        Wfc1=rnd(ks[14], (4, 4)), bfc1=rnd(ks[15], (4,)),
        Wfc2=rnd(ks[16], (1, 4)), bfc2=rnd(ks[17], (1,)),
    )


def build_packed_params(p):
    """Host-side: fold BN (eval mode), im2col, the conv spatial structure, and
    fc2∘fc1 into dense matrices, then pack everything into one (R_TOTAL, 128)
    f32 buffer (2 DMAs per grid step total: activations + this buffer)."""
    g = lambda name: np.asarray(p[name], np.float32)
    W1, b1, W2, b2 = g("W1"), g("b1"), g("W2"), g("b2")
    W3, b3, W4, b4 = g("W3"), g("b3"), g("W4"), g("b4")
    W5, b5 = g("W5"), g("b5")
    g1, be1, g2, be2 = g("g1"), g("be1"), g("g2"), g("be2")
    Wfc1, bfc1, Wfc2, bfc2 = g("Wfc1"), g("bfc1"), g("Wfc2"), g("bfc2")

    sc1 = g1 / np.sqrt(1.0 + EPS)          # BN eval fold (mean=0, var=1)
    sc2 = g2 / np.sqrt(1.0 + EPS)

    pk = np.zeros((R_TOTAL, 128), np.float32)

    # conv1 (+im2col, +bn1): x_flat col = ic*81 + y*9 + x ; h1 col = (oy*3+ox)*9 + c
    for c in range(9):
        for ic in range(2):
            for ky in range(3):
                for kx in range(3):
                    w = W1[c, ic, ky, kx] * sc1[c]
                    for oy in range(3):
                        for ox in range(3):
                            src = ic * 81 + (oy * 3 + ky) * 9 + (ox * 3 + kx)
                            dst = (oy * 3 + ox) * 9 + c
                            pk[ROW_W1 + src, dst] = w
        pk[ROW_B1, np.arange(9) * 9 + c] = b1[c] * sc1[c] + be1[c]

    # conv2 (+bn2): h1 col = p*9 + c (p over 3x3) ; h2 col = (oy*2+ox)*27 + c2
    for c2 in range(27):
        for c in range(9):
            for ky in range(2):
                for kx in range(2):
                    w = W2[c2, c, ky, kx] * sc2[c2]
                    for oy in range(2):
                        for ox in range(2):
                            src = ((oy + ky) * 3 + (ox + kx)) * 9 + c
                            dst = (oy * 2 + ox) * 27 + c2
                            pk[ROW_W2 + src, dst] = w
        pk[ROW_B2, np.arange(4) * 27 + c2] = b2[c2] * sc2[c2] + be2[c2]

    # conv3 (1x1, 27->1): h2 col q*27+c2 -> h3 col q  (q = oy*2+ox)
    for q in range(4):
        for c2 in range(27):
            pk[ROW_W3 + q * 27 + c2, q] = W3[0, c2, 0, 0]
    pk[ROW_B3, 0:4] = b3[0]

    # conv4: ConvTranspose2d(1,1,8): dense map 2x2 input -> 9x9 output
    for i in range(2):
        for j in range(2):
            for ky in range(8):
                for kx in range(8):
                    pk[ROW_M4 + i * 2 + j, (i + ky) * 9 + (j + kx)] += W4[0, 0, ky, kx]
    pk[ROW_B4, 0:81] = b4[0]

    # value head: fc2(fc1(.)) has no nonlinearity in between -> exact fold,
    # stuffed into column 81 of the convT4 map (free MXU output lanes).
    Wfc = Wfc1.T @ Wfc2.T                              # (4, 1)
    bfc = (bfc1 @ Wfc2.T + bfc2)[0]
    pk[ROW_M4:ROW_M4 + 4, 81] = Wfc[:, 0]
    pk[ROW_B4, 81] = bfc

    # conv5: ConvTranspose2d(1,9,1) weight/bias, pre-broadcast across 81 lanes
    for c in range(9):
        pk[ROW_W5 + c, 0:81] = W5[0, c, 0, 0]
        pk[ROW_B5 + c, 0:81] = b5[c]

    return jnp.asarray(pk)


# ------------------------------------------------------------------------- wrapper
def sudoku_forward(state, packed, *, batch_tile=512):
    B = state.shape[0]
    assert state.shape[1:] == (2, 9, 9)
    x = state.reshape(B, 2 * 81).astype(jnp.float32)   # trivial row-major flatten

    # Keep tb a multiple of 8; for moderate/large batches guarantee >= 2 grid
    # steps so the ("parallel",) batch axis shards across both TCs on v7x.
    half = (B + 1) // 2
    tb = max(8, min(batch_tile, ((half + 7) // 8) * 8))
    Bp = ((B + tb - 1) // tb) * tb
    if Bp != B:
        x = jnp.pad(x, ((0, Bp - B), (0, 0)))

    cost = pl.CostEstimate(
        flops=2 * Bp * (162 * 128 + 3 * 128 * 128),
        transcendentals=Bp * (9 * 81 + 81 + 1),
        bytes_accessed=4 * (Bp * 162 + R_TOTAL * 128 + Bp * 9 * 81 + Bp),
    )

    pi_k, v = pl.pallas_call(
        sudoku_kernel,
        out_shape=(jax.ShapeDtypeStruct((9, Bp, 81), jnp.float32),   # channel-major
                   jax.ShapeDtypeStruct((Bp, 1), jnp.float32)),
        grid=(Bp // tb,),
        in_specs=[pl.BlockSpec((tb, 162), lambda i: (i, 0)),
                  pl.BlockSpec((R_TOTAL, 128), lambda i: (0, 0))],
        out_specs=(pl.BlockSpec((9, tb, 81), lambda i: (0, i, 0)),
                   pl.BlockSpec((tb, 1), lambda i: (i, 0))),
        compiler_params=pltpu.CompilerParams(
            dimension_semantics=("parallel",),
            vmem_limit_bytes=32 * 1024 * 1024),
        cost_estimate=cost,
    )(x, packed)

    # channel-major (9, B, 81) -> PyTorch NCHW (B, 9, 9, 9)
    pi = jnp.transpose(pi_k[:, :B, :], (1, 0, 2)).reshape(B, 9, 9, 9)
    return pi, v[:B]


# ----------------------------------------------------------------- pure-JAX reference
def reference_forward(state, p):
    relu = lambda z: jnp.maximum(z, 0.0)

    def conv(x, W, b, stride=1):
        y = lax.conv_general_dilated(x, W, (stride, stride), "VALID",
                                     dimension_numbers=("NCHW", "OIHW", "NCHW"))
        return y + b.reshape(1, -1, 1, 1)

    def bn(x, gamma, beta):   # eval mode, mean=0, var=1
        return gamma.reshape(1, -1, 1, 1) * x / jnp.sqrt(1.0 + EPS) \
            + beta.reshape(1, -1, 1, 1)

    def convT(x, W, b):       # stride 1, no padding; W: (in, out, kh, kw)
        Wf = jnp.flip(W, (2, 3)).transpose(1, 0, 2, 3)
        kh, kw = W.shape[2], W.shape[3]
        y = lax.conv_general_dilated(x, Wf, (1, 1),
                                     ((kh - 1, kh - 1), (kw - 1, kw - 1)),
                                     dimension_numbers=("NCHW", "OIHW", "NCHW"))
        return y + b.reshape(1, -1, 1, 1)

    s = relu(bn(conv(state, p["W1"], p["b1"], 3), p["g1"], p["be1"]))
    s = relu(bn(conv(s, p["W2"], p["b2"]), p["g2"], p["be2"]))
    s = relu(conv(s, p["W3"], p["b3"]))
    v = s.reshape(-1, 4)
    v = v @ p["Wfc1"].T + p["bfc1"]
    v = v @ p["Wfc2"].T + p["bfc2"]
    pi = relu(convT(s, p["W4"], p["b4"]))
    pi = relu(convT(pi, p["W5"], p["b5"]))
    return jax.nn.log_softmax(pi, axis=1), jax.nn.sigmoid(v)


# ---------------------------------------------------------------------------- main
if __name__ == "__main__":
    key = jax.random.PRNGKey(0)
    pkey, xkey = jax.random.split(key)
    params = init_params(pkey)
    state = jax.random.normal(xkey, (N, 2, 9, 9), dtype=jnp.float32)

    packed = build_packed_params(params)
    pi, v = sudoku_forward(state, packed)
    jax.block_until_ready((pi, v))

    pi_ref, v_ref = reference_forward(state, params)
    np.testing.assert_allclose(np.asarray(pi), np.asarray(pi_ref), rtol=1e-4, atol=1e-4)
    np.testing.assert_allclose(np.asarray(v), np.asarray(v_ref), rtol=1e-4, atol=1e-4)

    print("KERNEL_OK")
</pallas_src>

<mosaic_0001>
module attributes {stable_mosaic.version = 11 : i64} {
  func.func @sudoku_kernel(%arg0: i32, %arg1: memref<8x162xf32, #tpu.memory_space<vmem>>, %arg2: memref<616x128xf32, #tpu.memory_space<vmem>>, %arg3: memref<9x8x81xf32, #tpu.memory_space<vmem>>, %arg4: memref<8x1xf32, #tpu.memory_space<vmem>>) attributes {dimension_semantics = [#tpu.dimension_semantics<parallel>], iteration_bounds = array<i64: 1>, scalar_prefetch = 0 : i64, scratch_operands = 0 : i64, tpu.core_type = #tpu.core_type<tc>, window_params = [{transform_indices = @transform_0, window_bounds = array<i64: 8, 162>}, {pipeline_mode = #tpu.pipeline_mode<synchronous>, transform_indices = @transform_1, window_bounds = array<i64: 616, 128>}, {transform_indices = @transform_2, window_bounds = array<i64: 9, 8, 81>}, {transform_indices = @transform_3, window_bounds = array<i64: 8, 1>}]} {
    %c0 = arith.constant 0 : index
    %c0_0 = arith.constant 0 : index
    %0 = vector.load %arg1[%c0, %c0_0] : memref<8x162xf32, #tpu.memory_space<vmem>>, vector<8x162xf32>
    %c0_1 = arith.constant 0 : index
    %c0_2 = arith.constant 0 : index
    %1 = vector.load %arg2[%c0_1, %c0_2] : memref<616x128xf32, #tpu.memory_space<vmem>>, vector<162x128xf32>
    %cst = arith.constant dense<0.000000e+00> : vector<8x128xf32>
    %2 = tpu.matmul %0, %1, %cst {dimension_numbers = #tpu.dot_dimension_numbers<[1], [0], [0], [1], [0, 0, 1, 1], [], []>} : vector<8x162xf32>, vector<162x128xf32>, vector<8x128xf32> -> vector<8x128xf32>
    %c168 = arith.constant 168 : index
    %c0_3 = arith.constant 0 : index
    %3 = vector.load %arg2[%c168, %c0_3] : memref<616x128xf32, #tpu.memory_space<vmem>>, vector<1x128xf32>
    %4 = vector.broadcast %3 : vector<1x128xf32> to vector<8x128xf32>
    %5 = arith.addf %2, %4 : vector<8x128xf32>
    %cst_4 = arith.constant 0.000000e+00 : f32
    %6 = vector.broadcast %cst_4 : f32 to vector<8x128xf32>
    %7 = arith.maximumf %5, %6 : vector<8x128xf32>
    %c176 = arith.constant 176 : index
    %c0_5 = arith.constant 0 : index
    %8 = vector.load %arg2[%c176, %c0_5] : memref<616x128xf32, #tpu.memory_space<vmem>>, vector<128x128xf32>
    %cst_6 = arith.constant dense<0.000000e+00> : vector<8x128xf32>
    %9 = tpu.matmul %7, %8, %cst_6 {dimension_numbers = #tpu.dot_dimension_numbers<[1], [0], [0], [1], [0, 0, 1, 1], [], []>} : vector<8x128xf32>, vector<128x128xf32>, vector<8x128xf32> -> vector<8x128xf32>
    %c304 = arith.constant 304 : index
    %c0_7 = arith.constant 0 : index
    %10 = vector.load %arg2[%c304, %c0_7] : memref<616x128xf32, #tpu.memory_space<vmem>>, vector<1x128xf32>
    %11 = vector.broadcast %10 : vector<1x128xf32> to vector<8x128xf32>
    %12 = arith.addf %9, %11 : vector<8x128xf32>
    %cst_8 = arith.constant 0.000000e+00 : f32
    %13 = vector.broadcast %cst_8 : f32 to vector<8x128xf32>
    %14 = arith.maximumf %12, %13 : vector<8x128xf32>
    %c312 = arith.constant 312 : index
    %c0_9 = arith.constant 0 : index
    %15 = vector.load %arg2[%c312, %c0_9] : memref<616x128xf32, #tpu.memory_space<vmem>>, vector<128x128xf32>
    %cst_10 = arith.constant dense<0.000000e+00> : vector<8x128xf32>
    %16 = tpu.matmul %14, %15, %cst_10 {dimension_numbers = #tpu.dot_dimension_numbers<[1], [0], [0], [1], [0, 0, 1, 1], [], []>} : vector<8x128xf32>, vector<128x128xf32>, vector<8x128xf32> -> vector<8x128xf32>
    %c440 = arith.constant 440 : index
    %c0_11 = arith.constant 0 : index
    %17 = vector.load %arg2[%c440, %c0_11] : memref<616x128xf32, #tpu.memory_space<vmem>>, vector<1x128xf32>
    %18 = vector.broadcast %17 : vector<1x128xf32> to vector<8x128xf32>
    %19 = arith.addf %16, %18 : vector<8x128xf32>
    %cst_12 = arith.constant 0.000000e+00 : f32
    %20 = vector.broadcast %cst_12 : f32 to vector<8x128xf32>
    %21 = arith.maximumf %19, %20 : vector<8x128xf32>
    %c448 = arith.constant 448 : index
    %c0_13 = arith.constant 0 : index
    %22 = vector.load %arg2[%c448, %c0_13] : memref<616x128xf32, #tpu.memory_space<vmem>>, vector<128x128xf32>
    %cst_14 = arith.constant dense<0.000000e+00> : vector<8x128xf32>
    %23 = tpu.matmul %21, %22, %cst_14 {dimension_numbers = #tpu.dot_dimension_numbers<[1], [0], [0], [1], [0, 0, 1, 1], [], []>} : vector<8x128xf32>, vector<128x128xf32>, vector<8x128xf32> -> vector<8x128xf32>
    %c576 = arith.constant 576 : index
    %c0_15 = arith.constant 0 : index
    %24 = vector.load %arg2[%c576, %c0_15] : memref<616x128xf32, #tpu.memory_space<vmem>>, vector<1x128xf32>
    %25 = vector.broadcast %24 : vector<1x128xf32> to vector<8x128xf32>
    %26 = arith.addf %23, %25 : vector<8x128xf32>
    %27 = vector.extract_strided_slice %26 {offsets = [0, 81], sizes = [8, 1], strides = [1, 1]} : vector<8x128xf32> to vector<8x1xf32>
    %cst_16 = arith.constant 0.000000e+00 : f32
    %28 = vector.broadcast %cst_16 : f32 to vector<8x1xf32>
    %29 = arith.subf %28, %27 : vector<8x1xf32>
    %30 = math.exp %29 : vector<8x1xf32>
    %cst_17 = arith.constant 1.000000e+00 : f32
    %31 = vector.broadcast %cst_17 : f32 to vector<8x1xf32>
    %32 = arith.addf %31, %30 : vector<8x1xf32>
    %cst_18 = arith.constant 1.000000e+00 : f32
    %33 = vector.broadcast %cst_18 : f32 to vector<8x1xf32>
    %34 = arith.divf %33, %32 : vector<8x1xf32>
    %c0_19 = arith.constant 0 : index
    %c0_20 = arith.constant 0 : index
    %35 = vector.load %arg4[%c0_19, %c0_20] : memref<8x1xf32, #tpu.memory_space<vmem>>, vector<8x1xf32>
    tpu.vector_store %arg4[%c0_19, %c0_20], %34 {strides = array<i32>} : memref<8x1xf32, #tpu.memory_space<vmem>>, vector<8x1xf32>,
    %36 = vector.extract_strided_slice %26 {offsets = [0, 0], sizes = [8, 81], strides = [1, 1]} : vector<8x128xf32> to vector<8x81xf32>
    %cst_21 = arith.constant 0.000000e+00 : f32
    %37 = vector.broadcast %cst_21 : f32 to vector<8x81xf32>
    %38 = arith.maximumf %36, %37 : vector<8x81xf32>
    %c584 = arith.constant 584 : index
    %c0_22 = arith.constant 0 : index
    %39 = vector.load %arg2[%c584, %c0_22] : memref<616x128xf32, #tpu.memory_space<vmem>>, vector<1x81xf32>
    %c600 = arith.constant 600 : index
    %c0_23 = arith.constant 0 : index
    %40 = vector.load %arg2[%c600, %c0_23] : memref<616x128xf32, #tpu.memory_space<vmem>>, vector<1x81xf32>
    %41 = vector.broadcast %39 : vector<1x81xf32> to vector<8x81xf32>
    %42 = arith.mulf %38, %41 : vector<8x81xf32>
    %43 = vector.broadcast %40 : vector<1x81xf32> to vector<8x81xf32>
    %44 = arith.addf %42, %43 : vector<8x81xf32>
    %cst_24 = arith.constant 0.000000e+00 : f32
    %45 = vector.broadcast %cst_24 : f32 to vector<8x81xf32>
    %46 = arith.maximumf %44, %45 : vector<8x81xf32>
    %c585 = arith.constant 585 : index
    %c0_25 = arith.constant 0 : index
    %47 = vector.load %arg2[%c585, %c0_25] : memref<616x128xf32, #tpu.memory_space<vmem>>, vector<1x81xf32>
    %c601 = arith.constant 601 : index
    %c0_26 = arith.constant 0 : index
    %48 = vector.load %arg2[%c601, %c0_26] : memref<616x128xf32, #tpu.memory_space<vmem>>, vector<1x81xf32>
    %49 = vector.broadcast %47 : vector<1x81xf32> to vector<8x81xf32>
    %50 = arith.mulf %38, %49 : vector<8x81xf32>
    %51 = vector.broadcast %48 : vector<1x81xf32> to vector<8x81xf32>
    %52 = arith.addf %50, %51 : vector<8x81xf32>
    %cst_27 = arith.constant 0.000000e+00 : f32
    %53 = vector.broadcast %cst_27 : f32 to vector<8x81xf32>
    %54 = arith.maximumf %52, %53 : vector<8x81xf32>
    %55 = arith.maximumf %46, %54 : vector<8x81xf32>
    %c586 = arith.constant 586 : index
    %c0_28 = arith.constant 0 : index
    %56 = vector.load %arg2[%c586, %c0_28] : memref<616x128xf32, #tpu.memory_space<vmem>>, vector<1x81xf32>
    %c602 = arith.constant 602 : index
    %c0_29 = arith.constant 0 : index
    %57 = vector.load %arg2[%c602, %c0_29] : memref<616x128xf32, #tpu.memory_space<vmem>>, vector<1x81xf32>
    %58 = vector.broadcast %56 : vector<1x81xf32> to vector<8x81xf32>
    %59 = arith.mulf %38, %58 : vector<8x81xf32>
    %60 = vector.broadcast %57 : vector<1x81xf32> to vector<8x81xf32>
    %61 = arith.addf %59, %60 : vector<8x81xf32>
    %cst_30 = arith.constant 0.000000e+00 : f32
    %62 = vector.broadcast %cst_30 : f32 to vector<8x81xf32>
    %63 = arith.maximumf %61, %62 : vector<8x81xf32>
    %64 = arith.maximumf %55, %63 : vector<8x81xf32>
    %c587 = arith.constant 587 : index
    %c0_31 = arith.constant 0 : index
    %65 = vector.load %arg2[%c587, %c0_31] : memref<616x128xf32, #tpu.memory_space<vmem>>, vector<1x81xf32>
    %c603 = arith.constant 603 : index
    %c0_32 = arith.constant 0 : index
    %66 = vector.load %arg2[%c603, %c0_32] : memref<616x128xf32, #tpu.memory_space<vmem>>, vector<1x81xf32>
    %67 = vector.broadcast %65 : vector<1x81xf32> to vector<8x81xf32>
    %68 = arith.mulf %38, %67 : vector<8x81xf32>
    %69 = vector.broadcast %66 : vector<1x81xf32> to vector<8x81xf32>
    %70 = arith.addf %68, %69 : vector<8x81xf32>
    %cst_33 = arith.constant 0.000000e+00 : f32
    %71 = vector.broadcast %cst_33 : f32 to vector<8x81xf32>
    %72 = arith.maximumf %70, %71 : vector<8x81xf32>
    %73 = arith.maximumf %64, %72 : vector<8x81xf32>
    %c588 = arith.constant 588 : index
    %c0_34 = arith.constant 0 : index
    %74 = vector.load %arg2[%c588, %c0_34] : memref<616x128xf32, #tpu.memory_space<vmem>>, vector<1x81xf32>
    %c604 = arith.constant 604 : index
    %c0_35 = arith.constant 0 : index
    %75 = vector.load %arg2[%c604, %c0_35] : memref<616x128xf32, #tpu.memory_space<vmem>>, vector<1x81xf32>
    %76 = vector.broadcast %74 : vector<1x81xf32> to vector<8x81xf32>
    %77 = arith.mulf %38, %76 : vector<8x81xf32>
    %78 = vector.broadcast %75 : vector<1x81xf32> to vector<8x81xf32>
    %79 = arith.addf %77, %78 : vector<8x81xf32>
    %cst_36 = arith.constant 0.000000e+00 : f32
    %80 = vector.broadcast %cst_36 : f32 to vector<8x81xf32>
    %81 = arith.maximumf %79, %80 : vector<8x81xf32>
    %82 = arith.maximumf %73, %81 : vector<8x81xf32>
    %c589 = arith.constant 589 : index
    %c0_37 = arith.constant 0 : index
    %83 = vector.load %arg2[%c589, %c0_37] : memref<616x128xf32, #tpu.memory_space<vmem>>, vector<1x81xf32>
    %c605 = arith.constant 605 : index
    %c0_38 = arith.constant 0 : index
    %84 = vector.load %arg2[%c605, %c0_38] : memref<616x128xf32, #tpu.memory_space<vmem>>, vector<1x81xf32>
    %85 = vector.broadcast %83 : vector<1x81xf32> to vector<8x81xf32>
    %86 = arith.mulf %38, %85 : vector<8x81xf32>
    %87 = vector.broadcast %84 : vector<1x81xf32> to vector<8x81xf32>
    %88 = arith.addf %86, %87 : vector<8x81xf32>
    %cst_39 = arith.constant 0.000000e+00 : f32
    %89 = vector.broadcast %cst_39 : f32 to vector<8x81xf32>
    %90 = arith.maximumf %88, %89 : vector<8x81xf32>
    %91 = arith.maximumf %82, %90 : vector<8x81xf32>
    %c590 = arith.constant 590 : index
    %c0_40 = arith.constant 0 : index
    %92 = vector.load %arg2[%c590, %c0_40] : memref<616x128xf32, #tpu.memory_space<vmem>>, vector<1x81xf32>
    %c606 = arith.constant 606 : index
    %c0_41 = arith.constant 0 : index
    %93 = vector.load %arg2[%c606, %c0_41] : memref<616x128xf32, #tpu.memory_space<vmem>>, vector<1x81xf32>
    %94 = vector.broadcast %92 : vector<1x81xf32> to vector<8x81xf32>
    %95 = arith.mulf %38, %94 : vector<8x81xf32>
    %96 = vector.broadcast %93 : vector<1x81xf32> to vector<8x81xf32>
    %97 = arith.addf %95, %96 : vector<8x81xf32>
    %cst_42 = arith.constant 0.000000e+00 : f32
    %98 = vector.broadcast %cst_42 : f32 to vector<8x81xf32>
    %99 = arith.maximumf %97, %98 : vector<8x81xf32>
    %100 = arith.maximumf %91, %99 : vector<8x81xf32>
    %c591 = arith.constant 591 : index
    %c0_43 = arith.constant 0 : index
    %101 = vector.load %arg2[%c591, %c0_43] : memref<616x128xf32, #tpu.memory_space<vmem>>, vector<1x81xf32>
    %c607 = arith.constant 607 : index
    %c0_44 = arith.constant 0 : index
    %102 = vector.load %arg2[%c607, %c0_44] : memref<616x128xf32, #tpu.memory_space<vmem>>, vector<1x81xf32>
    %103 = vector.broadcast %101 : vector<1x81xf32> to vector<8x81xf32>
    %104 = arith.mulf %38, %103 : vector<8x81xf32>
    %105 = vector.broadcast %102 : vector<1x81xf32> to vector<8x81xf32>
    %106 = arith.addf %104, %105 : vector<8x81xf32>
    %cst_45 = arith.constant 0.000000e+00 : f32
    %107 = vector.broadcast %cst_45 : f32 to vector<8x81xf32>
    %108 = arith.maximumf %106, %107 : vector<8x81xf32>
    %109 = arith.maximumf %100, %108 : vector<8x81xf32>
    %c592 = arith.constant 592 : index
    %c0_46 = arith.constant 0 : index
    %110 = vector.load %arg2[%c592, %c0_46] : memref<616x128xf32, #tpu.memory_space<vmem>>, vector<1x81xf32>
    %c608 = arith.constant 608 : index
    %c0_47 = arith.constant 0 : index
    %111 = vector.load %arg2[%c608, %c0_47] : memref<616x128xf32, #tpu.memory_space<vmem>>, vector<1x81xf32>
    %112 = vector.broadcast %110 : vector<1x81xf32> to vector<8x81xf32>
    %113 = arith.mulf %38, %112 : vector<8x81xf32>
    %114 = vector.broadcast %111 : vector<1x81xf32> to vector<8x81xf32>
    %115 = arith.addf %113, %114 : vector<8x81xf32>
    %cst_48 = arith.constant 0.000000e+00 : f32
    %116 = vector.broadcast %cst_48 : f32 to vector<8x81xf32>
    %117 = arith.maximumf %115, %116 : vector<8x81xf32>
    %118 = arith.maximumf %109, %117 : vector<8x81xf32>
    %119 = arith.subf %46, %118 : vector<8x81xf32>
    %120 = math.exp %119 : vector<8x81xf32>
    %121 = arith.subf %54, %118 : vector<8x81xf32>
    %122 = math.exp %121 : vector<8x81xf32>
    %123 = arith.addf %120, %122 : vector<8x81xf32>
    %124 = arith.subf %63, %118 : vector<8x81xf32>
    %125 = math.exp %124 : vector<8x81xf32>
    %126 = arith.addf %123, %125 : vector<8x81xf32>
    %127 = arith.subf %72, %118 : vector<8x81xf32>
    %128 = math.exp %127 : vector<8x81xf32>
    %129 = arith.addf %126, %128 : vector<8x81xf32>
    %130 = arith.subf %81, %118 : vector<8x81xf32>
    %131 = math.exp %130 : vector<8x81xf32>
    %132 = arith.addf %129, %131 : vector<8x81xf32>
    %133 = arith.subf %90, %118 : vector<8x81xf32>
    %134 = math.exp %133 : vector<8x81xf32>
    %135 = arith.addf %132, %134 : vector<8x81xf32>
    %136 = arith.subf %99, %118 : vector<8x81xf32>
    %137 = math.exp %136 : vector<8x81xf32>
    %138 = arith.addf %135, %137 : vector<8x81xf32>
    %139 = arith.subf %108, %118 : vector<8x81xf32>
    %140 = math.exp %139 : vector<8x81xf32>
    %141 = arith.addf %138, %140 : vector<8x81xf32>
    %142 = arith.subf %117, %118 : vector<8x81xf32>
    %143 = math.exp %142 : vector<8x81xf32>
    %144 = arith.addf %141, %143 : vector<8x81xf32>
    %145 = math.log %144 : vector<8x81xf32>
    %146 = arith.addf %118, %145 : vector<8x81xf32>
    %147 = arith.subf %46, %146 : vector<8x81xf32>
    %c0_49 = arith.constant 0 : index
    %c0_50 = arith.constant 0 : index
    %c0_51 = arith.constant 0 : index
    %148 = vector.load %arg3[%c0_49, %c0_50, %c0_51] : memref<9x8x81xf32, #tpu.memory_space<vmem>>, vector<1x8x81xf32>
    %149 = vector.shape_cast %148 : vector<1x8x81xf32> to vector<8x81xf32>
    %150 = vector.shape_cast %147 : vector<8x81xf32> to vector<1x8x81xf32>
    tpu.vector_store %arg3[%c0_49, %c0_50, %c0_51], %150 {strides = array<i32>} : memref<9x8x81xf32, #tpu.memory_space<vmem>>, vector<1x8x81xf32>,
    %151 = arith.subf %54, %146 : vector<8x81xf32>
    %c1 = arith.constant 1 : index
    %c0_52 = arith.constant 0 : index
    %c0_53 = arith.constant 0 : index
    %152 = vector.load %arg3[%c1, %c0_52, %c0_53] : memref<9x8x81xf32, #tpu.memory_space<vmem>>, vector<1x8x81xf32>
    %153 = vector.shape_cast %152 : vector<1x8x81xf32> to vector<8x81xf32>
    %154 = vector.shape_cast %151 : vector<8x81xf32> to vector<1x8x81xf32>
    tpu.vector_store %arg3[%c1, %c0_52, %c0_53], %154 {strides = array<i32>} : memref<9x8x81xf32, #tpu.memory_space<vmem>>, vector<1x8x81xf32>,
    %155 = arith.subf %63, %146 : vector<8x81xf32>
    %c2 = arith.constant 2 : index
    %c0_54 = arith.constant 0 : index
    %c0_55 = arith.constant 0 : index
    %156 = vector.load %arg3[%c2, %c0_54, %c0_55] : memref<9x8x81xf32, #tpu.memory_space<vmem>>, vector<1x8x81xf32>
    %157 = vector.shape_cast %156 : vector<1x8x81xf32> to vector<8x81xf32>
    %158 = vector.shape_cast %155 : vector<8x81xf32> to vector<1x8x81xf32>
    tpu.vector_store %arg3[%c2, %c0_54, %c0_55], %158 {strides = array<i32>} : memref<9x8x81xf32, #tpu.memory_space<vmem>>, vector<1x8x81xf32>,
    %159 = arith.subf %72, %146 : vector<8x81xf32>
    %c3 = arith.constant 3 : index
    %c0_56 = arith.constant 0 : index
    %c0_57 = arith.constant 0 : index
    %160 = vector.load %arg3[%c3, %c0_56, %c0_57] : memref<9x8x81xf32, #tpu.memory_space<vmem>>, vector<1x8x81xf32>
    %161 = vector.shape_cast %160 : vector<1x8x81xf32> to vector<8x81xf32>
    %162 = vector.shape_cast %159 : vector<8x81xf32> to vector<1x8x81xf32>
    tpu.vector_store %arg3[%c3, %c0_56, %c0_57], %162 {strides = array<i32>} : memref<9x8x81xf32, #tpu.memory_space<vmem>>, vector<1x8x81xf32>,
    %163 = arith.subf %81, %146 : vector<8x81xf32>
    %c4 = arith.constant 4 : index
    %c0_58 = arith.constant 0 : index
    %c0_59 = arith.constant 0 : index
    %164 = vector.load %arg3[%c4, %c0_58, %c0_59] : memref<9x8x81xf32, #tpu.memory_space<vmem>>, vector<1x8x81xf32>
    %165 = vector.shape_cast %164 : vector<1x8x81xf32> to vector<8x81xf32>
    %166 = vector.shape_cast %163 : vector<8x81xf32> to vector<1x8x81xf32>
    tpu.vector_store %arg3[%c4, %c0_58, %c0_59], %166 {strides = array<i32>} : memref<9x8x81xf32, #tpu.memory_space<vmem>>, vector<1x8x81xf32>,
    %167 = arith.subf %90, %146 : vector<8x81xf32>
    %c5 = arith.constant 5 : index
    %c0_60 = arith.constant 0 : index
    %c0_61 = arith.constant 0 : index
    %168 = vector.load %arg3[%c5, %c0_60, %c0_61] : memref<9x8x81xf32, #tpu.memory_space<vmem>>, vector<1x8x81xf32>
    %169 = vector.shape_cast %168 : vector<1x8x81xf32> to vector<8x81xf32>
    %170 = vector.shape_cast %167 : vector<8x81xf32> to vector<1x8x81xf32>
    tpu.vector_store %arg3[%c5, %c0_60, %c0_61], %170 {strides = array<i32>} : memref<9x8x81xf32, #tpu.memory_space<vmem>>, vector<1x8x81xf32>,
    %171 = arith.subf %99, %146 : vector<8x81xf32>
    %c6 = arith.constant 6 : index
    %c0_62 = arith.constant 0 : index
    %c0_63 = arith.constant 0 : index
    %172 = vector.load %arg3[%c6, %c0_62, %c0_63] : memref<9x8x81xf32, #tpu.memory_space<vmem>>, vector<1x8x81xf32>
    %173 = vector.shape_cast %172 : vector<1x8x81xf32> to vector<8x81xf32>
    %174 = vector.shape_cast %171 : vector<8x81xf32> to vector<1x8x81xf32>
    tpu.vector_store %arg3[%c6, %c0_62, %c0_63], %174 {strides = array<i32>} : memref<9x8x81xf32, #tpu.memory_space<vmem>>, vector<1x8x81xf32>,
    %175 = arith.subf %108, %146 : vector<8x81xf32>
    %c7 = arith.constant 7 : index
    %c0_64 = arith.constant 0 : index
    %c0_65 = arith.constant 0 : index
    %176 = vector.load %arg3[%c7, %c0_64, %c0_65] : memref<9x8x81xf32, #tpu.memory_space<vmem>>, vector<1x8x81xf32>
    %177 = vector.shape_cast %176 : vector<1x8x81xf32> to vector<8x81xf32>
    %178 = vector.shape_cast %175 : vector<8x81xf32> to vector<1x8x81xf32>
    tpu.vector_store %arg3[%c7, %c0_64, %c0_65], %178 {strides = array<i32>} : memref<9x8x81xf32, #tpu.memory_space<vmem>>, vector<1x8x81xf32>,
    %179 = arith.subf %117, %146 : vector<8x81xf32>
    %c8 = arith.constant 8 : index
    %c0_66 = arith.constant 0 : index
    %c0_67 = arith.constant 0 : index
    %180 = vector.load %arg3[%c8, %c0_66, %c0_67] : memref<9x8x81xf32, #tpu.memory_space<vmem>>, vector<1x8x81xf32>
    %181 = vector.shape_cast %180 : vector<1x8x81xf32> to vector<8x81xf32>
    %182 = vector.shape_cast %179 : vector<8x81xf32> to vector<1x8x81xf32>
    tpu.vector_store %arg3[%c8, %c0_66, %c0_67], %182 {strides = array<i32>} : memref<9x8x81xf32, #tpu.memory_space<vmem>>, vector<1x8x81xf32>,
    return
  }
  func.func @transform_0(%arg0: i32) -> (i32, i32) {
    %c0_i32 = arith.constant 0 : i32
    %c0_i32_0 = arith.constant 0 : i32
    return %arg0, %c0_i32 : i32, i32
  }
  func.func @transform_1(%arg0: i32) -> (i32, i32) {
    %c0_i32 = arith.constant 0 : i32
    %c0_i32_0 = arith.constant 0 : i32
    %c0_i32_1 = arith.constant 0 : i32
    return %c0_i32, %c0_i32_0 : i32, i32
  }
  func.func @transform_2(%arg0: i32) -> (i32, i32, i32) {
    %c0_i32 = arith.constant 0 : i32
    %c0_i32_0 = arith.constant 0 : i32
    %c0_i32_1 = arith.constant 0 : i32
    return %c0_i32, %arg0, %c0_i32_0 : i32, i32, i32
  }
  func.func @transform_3(%arg0: i32) -> (i32, i32) {
    %c0_i32 = arith.constant 0 : i32
    %c0_i32_0 = arith.constant 0 : i32
    return %arg0, %c0_i32 : i32, i32
  }
}

</mosaic_0001>

<llo_original>
// kernel: tpu_custom_call.1
$region0: #{tpu_custom_call.1}
  #allocation0 [shape = 'u32[]', space=smem, size = 0x4, offset = 0x4, fixed_abs, tag = 'smem constant byte address 0x4 - core index']
  #allocation1 [shape = 'u32[144,128]{1,0:T(1,128)}', space=vmem, size = 0x12000, scoped, tag = 'internal scratch']
  %s0 = inlined_call_operand.hbm [shape: f32[8,162], index: 0, kind: input, shape index: {}]
  %s1 = inlined_call_operand.hbm [shape: f32[616,128], index: 1, kind: input, shape index: {}]
  %s2 = inlined_call_operand.hbm [shape: f32[9,8,81], index: 2, kind: output, shape index: {0}]
  %s3 = inlined_call_operand.vmem [shape: f32[8,1], index: 3, kind: output, shape index: {1}]
  %4 = xla_tuple %s2, %s3
  %s5 = sld [smem:[#allocation0]]
  $region34: #{tpu_custom_call.1} parent=0
    _
  %s7 = ssub.s32 1, %s5
  %s8 = scalar_select 0, %s7, %s5
  $region1: #{tpu_custom_call.1} parent=0
    #allocation2 [shape = 'u8[8192]{0}', space=vmem, size = 0x2000, scoped, tag = 'input window, operand 0, single buffered']
    #allocation3 [shape = 's32[1]{0}', space=sflag, size = 0x4, scoped, tag = 'scoped memory for tpu_custom_call.1']
    #allocation4 [shape = 's32[1]{0}', space=sflag, size = 0x4, scoped, tag = 'scoped memory for tpu_custom_call.1']
    #allocation5 [shape = 'u8[315392]{0}', space=vmem, size = 0x4d000, scoped, tag = 'input window, operand 1, single buffered']
    #allocation6 [shape = 's32[1]{0}', space=sflag, size = 0x4, scoped, tag = 'scoped memory for tpu_custom_call.1']
    #allocation7 [shape = 'u8[36864]{0}', space=vmem, size = 0x9000, scoped, tag = 'output window, operand 0, single buffered']
    %9 = vsyncpa [#allocation3], 0
    %10 = vsyncpa [#allocation6], 0
    %11 = vsyncpa [#allocation4], 0
    // Predicated region
    $region2: #{tpu_custom_call.1} parent=1 // pred_check
      _
    $region3: #{tpu_custom_call.1} parent=1 // pred_check_branch
      %13 = sbr.rel (0) target = $region5
    $region4: #{tpu_custom_call.1} parent=1 // pred_region
      %s15 = ssub.s32 256, 256
      %16 = vsyncadd [#allocation3], %s15
      %s18 = sshll.u32 [#allocation2], 4
      %s19 = int_to_ptr.vmem [resolvable:$true] %s18
      %21 = dma.hbm_to_vmem [thread:$0]  %s0, 256, %s19, [#allocation3]
    $region5: #{tpu_custom_call.1} parent=1 // pred_fallthru
      _
    // Predicated region
    $region6: #{tpu_custom_call.1} parent=1 // pred_check
      _
    $region7: #{tpu_custom_call.1} parent=1 // pred_check_branch
      %23 = sbr.rel (0) target = $region9
    $region8: #{tpu_custom_call.1} parent=1 // pred_region
      %s25 = ssub.s32 9856, 9856
      %26 = vsyncadd [#allocation6], %s25
      %s27 = sshll.u32 [#allocation5], 4
      %s28 = int_to_ptr.vmem [resolvable:$true] %s27
      %33 = dma.hbm_to_vmem [thread:$0]  %s1, 9856, %s28, [#allocation6], 128, 128, 8
    $region9: #{tpu_custom_call.1} parent=1 // pred_fallthru
      _
    // Predicated region
    $region10: #{tpu_custom_call.1} parent=1 // pred_check
      _
    $region11: #{tpu_custom_call.1} parent=1 // pred_check_branch
      %35 = sbr.rel (0) target = $region13
    $region12: #{tpu_custom_call.1} parent=1 // pred_region
      %36 = dma.done [#allocation3], 256
    $region13: #{tpu_custom_call.1} parent=1 // pred_fallthru
      _
    // Predicated region
    $region14: #{tpu_custom_call.1} parent=1 // pred_check
      _
    $region15: #{tpu_custom_call.1} parent=1 // pred_check_branch
      %38 = sbr.rel (0) target = $region17
    $region16: #{tpu_custom_call.1} parent=1 // pred_region
      %39 = dma.done [#allocation6], 9856
    $region17: #{tpu_custom_call.1} parent=1 // pred_fallthru
      _
    %v40 = vld [vmem:[#allocation2] sm:$0xff]
    %v41 = vld [vmem:[#allocation2 + $0x8] sm:$0xff]
    %v42 = vld [vmem:[#allocation5] sm:$0xff]
    %v43 = vld [vmem:[#allocation5 + $0x8] sm:$0xff]
    %v44 = vld [vmem:[#allocation5 + $0x10] sm:$0xff]
    %v45 = vld [vmem:[#allocation5 + $0x18] sm:$0xff]
    %v46 = vld [vmem:[#allocation5 + $0x20] sm:$0xff]
    %v47 = vld [vmem:[#allocation5 + $0x28] sm:$0xff]
    %v48 = vld [vmem:[#allocation5 + $0x30] sm:$0xff]
    %v49 = vld [vmem:[#allocation5 + $0x38] sm:$0xff]
    %v50 = vld [vmem:[#allocation5 + $0x40] sm:$0xff]
    %v51 = vld [vmem:[#allocation5 + $0x48] sm:$0xff]
    %v52 = vld [vmem:[#allocation5 + $0x50] sm:$0xff]
    %v53 = vld [vmem:[#allocation5 + $0x58] sm:$0xff]
    %v54 = vld [vmem:[#allocation5 + $0x60] sm:$0xff]
    %v55 = vld [vmem:[#allocation5 + $0x68] sm:$0xff]
    %v56 = vld [vmem:[#allocation5 + $0x70] sm:$0xff]
    %v57 = vld [vmem:[#allocation5 + $0x78] sm:$0xff]
    %v58 = vld [vmem:[#allocation5 + $0x80] sm:$0xff]
    %v59 = vld [vmem:[#allocation5 + $0x88] sm:$0xff]
    %v60 = vld [vmem:[#allocation5 + $0x90] sm:$0xff]
    %v61 = vld [vmem:[#allocation5 + $0x98] sm:$0xff]
    %v62 = vld [vmem:[#allocation5 + $0xa0] sm:$0x3]
    %v63 = vld [vmem:[#allocation5 + $0xa8] sm:$0x1]
    %v64 = vlaneseq
    %v65 = vshrl.u32 %v64, 7
    %v66 = vsub.s32 0, %v65
    %v67 = vrot.slane %v63, %v66
    %vm68 = vcmask 277504
    %v70 = vsel %vm68, %v41, 0
    %vm72 = vcmask 1041408
    %v74 = vsel %vm72, %v62, 0
    %76 = vmatprep.subr.mxu0 0.0
    %77 = vmatpush1.msra.mxu0 %v42
    %78 = vmatprep.subr.mxu0 0.0
    %79 = vmatpush1.msra.mxu0 %v43
    %80 = vmatprep.subr.mxu0 0.0
    %81 = vmatpush1.msra.mxu0 %v44
    %82 = vmatprep.subr.mxu0 0.0
    %83 = vmatpush1.msra.mxu0 %v45
    %84 = vmatprep.subr.mxu0 0.0
    %85 = vmatpush1.msra.mxu0 %v46
    %86 = vmatprep.subr.mxu0 0.0
    %87 = vmatpush1.msra.mxu0 %v47
    %88 = vmatprep.subr.mxu0 0.0
    %89 = vmatpush1.msra.mxu0 %v48
    %90 = vmatprep.subr.mxu0 0.0
    %91 = vmatpush1.msra.mxu0 %v49
    %92 = vmatprep.subr.mxu0 0.0
    %93 = vmatpush1.msra.mxu0 %v50
    %94 = vmatprep.subr.mxu0 0.0
    %95 = vmatpush1.msra.mxu0 %v51
    %96 = vmatprep.subr.mxu0 0.0
    %97 = vmatpush1.msra.mxu0 %v52
    %98 = vmatprep.subr.mxu0 0.0
    %99 = vmatpush1.msra.mxu0 %v53
    %100 = vmatprep.subr.mxu0 0.0
    %101 = vmatpush1.msra.mxu0 %v54
    %102 = vmatprep.subr.mxu0 0.0
    %103 = vmatpush1.msra.mxu0 %v55
    %104 = vmatprep.subr.mxu0 0.0
    %105 = vmatpush1.msra.mxu0 %v56
    %106 = vmatprep.subr.mxu0 0.0
    %107 = vmatpush1.msra.mxu0 %v57
    %108 = vmatprep.subr.mxu0 0.0
    %109 = vmatpush1.msra.mxu0 %v58
    %110 = vmatprep.subr.mxu0 0.0
    %111 = vmatpush1.msra.mxu0 %v59
    %112 = vmatprep.subr.mxu0 0.0
    %113 = vmatpush1.msra.mxu0 %v60
    %114 = vmatprep.subr.mxu0 0.0
    %115 = vmatpush1.msra.mxu0 %v61
    %116 = vmatprep.subr.mxu0 0.0
    %117 = vmatpush1.msra.mxu0 %v74
    %118 = vmatprep.subr.mxu0 0.0
    %119 = vmatpush1.msra.mxu0 0.0
    %120 = vmatprep.subr.mxu0 0.0
    %121 = vmatpush1.msra.mxu0 0.0
    %122 = vmatprep.subr.mxu0 0.0
    %123 = vmatpush1.msra.mxu0 0.0
    %124 = vmatprep.subr.mxu0 0.0
    %125 = vmatpush1.msra.mxu0 0.0
    %126 = vmatprep.subr.mxu0 0.0
    %127 = vmatpush1.msra.mxu0 0.0
    %128 = vmatprep.subr.mxu0 0.0
    %129 = vmatpush1.msra.mxu0 0.0
    %130 = vmatprep.subr.mxu0 0.0
    %131 = vmatpush1.msra.mxu0 0.0
    %132 = vmatprep.subr.mxu0 0.0
    %133 = vmatpush1.msra.mxu0 0.0
    %134 = vmatprep.subr.mxu0 0.0
    %135 = vmatpush1.msra.mxu0 0.0
    %136 = vmatprep.subr.mxu0 0.0
    %137 = vmatpush1.msra.mxu0 0.0
    %138 = vmatprep.subr.mxu0 0.0
    %139 = vmatpush1.msra.mxu0 0.0
    %140 = vmatprep.mubr.f32.mxu0 %v70
    %141 = vmatmul.mubr.f32.gmra.mrb[0].mxu0 %v40
    %v142 = vpop.f32.mrb[0].mxu0
    %v143 = vadd.f32 %v67, %v142
    %v144 = vpop.f32.mrb[0].mxu0
    %145 = vdwg.mxu0
    %v146 = vmax.f32 %v143, 0.0
    %v147 = vld [vmem:[#allocation5 + $0xb0] sm:$0xff]
    %v148 = vld [vmem:[#allocation5 + $0xb8] sm:$0xff]
    %v149 = vld [vmem:[#allocation5 + $0xc0] sm:$0xff]
    %v150 = vld [vmem:[#allocation5 + $0xc8] sm:$0xff]
    %v151 = vld [vmem:[#allocation5 + $0xd0] sm:$0xff]
    %v152 = vld [vmem:[#allocation5 + $0xd8] sm:$0xff]
    %v153 = vld [vmem:[#allocation5 + $0xe0] sm:$0xff]
    %v154 = vld [vmem:[#allocation5 + $0xe8] sm:$0xff]
    %v155 = vld [vmem:[#allocation5 + $0xf0] sm:$0xff]
    %v156 = vld [vmem:[#allocation5 + $0xf8] sm:$0xff]
    %v157 = vld [vmem:[#allocation5 + $0x100] sm:$0xff]
    %v158 = vld [vmem:[#allocation5 + $0x108] sm:$0xff]
    %v159 = vld [vmem:[#allocation5 + $0x110] sm:$0xff]
    %v160 = vld [vmem:[#allocation5 + $0x118] sm:$0xff]
    %v161 = vld [vmem:[#allocation5 + $0x120] sm:$0xff]
    %v162 = vld [vmem:[#allocation5 + $0x128] sm:$0xff]
    %v163 = vld [vmem:[#allocation5 + $0x130] sm:$0x1]
    %v164 = vlaneseq
    %v165 = vshrl.u32 %v164, 7
    %v166 = vsub.s32 0, %v165
    %v167 = vrot.slane %v163, %v166
    %168 = vmatprep.subr.mxu0 0.0
    %169 = vmatpush1.msra.mxu0 %v147
    %170 = vmatprep.subr.mxu0 0.0
    %171 = vmatpush1.msra.mxu0 %v148
    %172 = vmatprep.subr.mxu0 0.0
    %173 = vmatpush1.msra.mxu0 %v149
    %174 = vmatprep.subr.mxu0 0.0
    %175 = vmatpush1.msra.mxu0 %v150
    %176 = vmatprep.subr.mxu0 0.0
    %177 = vmatpush1.msra.mxu0 %v151
    %178 = vmatprep.subr.mxu0 0.0
    %179 = vmatpush1.msra.mxu0 %v152
    %180 = vmatprep.subr.mxu0 0.0
    %181 = vmatpush1.msra.mxu0 %v153
    %182 = vmatprep.subr.mxu0 0.0
    %183 = vmatpush1.msra.mxu0 %v154
    %184 = vmatprep.subr.mxu0 0.0
    %185 = vmatpush1.msra.mxu0 %v155
    %186 = vmatprep.subr.mxu0 0.0
    %187 = vmatpush1.msra.mxu0 %v156
    %188 = vmatprep.subr.mxu0 0.0
    %189 = vmatpush1.msra.mxu0 %v157
    %190 = vmatprep.subr.mxu0 0.0
    %191 = vmatpush1.msra.mxu0 %v158
    %192 = vmatprep.subr.mxu0 0.0
    %193 = vmatpush1.msra.mxu0 %v159
    %194 = vmatprep.subr.mxu0 0.0
    %195 = vmatpush1.msra.mxu0 %v160
    %196 = vmatprep.subr.mxu0 0.0
    %197 = vmatpush1.msra.mxu0 %v161
    %198 = vmatprep.subr.mxu0 0.0
    %199 = vmatpush1.msra.mxu0 %v162
    %200 = vmatprep.subr.mxu0 0.0
    %201 = vmatpush1.msra.mxu0 0.0
    %202 = vmatprep.subr.mxu0 0.0
    %203 = vmatpush1.msra.mxu0 0.0
    %204 = vmatprep.subr.mxu0 0.0
    %205 = vmatpush1.msra.mxu0 0.0
    %206 = vmatprep.subr.mxu0 0.0
    %207 = vmatpush1.msra.mxu0 0.0
    %208 = vmatprep.subr.mxu0 0.0
    %209 = vmatpush1.msra.mxu0 0.0
    %210 = vmatprep.subr.mxu0 0.0
    %211 = vmatpush1.msra.mxu0 0.0
    %212 = vmatprep.subr.mxu0 0.0
    %213 = vmatpush1.msra.mxu0 0.0
    %214 = vmatprep.subr.mxu0 0.0
    %215 = vmatpush1.msra.mxu0 0.0
    %216 = vmatprep.subr.mxu0 0.0
    %217 = vmatpush1.msra.mxu0 0.0
    %218 = vmatprep.subr.mxu0 0.0
    %219 = vmatpush1.msra.mxu0 0.0
    %220 = vmatprep.subr.mxu0 0.0
    %221 = vmatpush1.msra.mxu0 0.0
    %222 = vmatprep.subr.mxu0 0.0
    %223 = vmatpush1.msra.mxu0 0.0
    %224 = vmatprep.subr.mxu0 0.0
    %225 = vmatpush1.msra.mxu0 0.0
    %226 = vmatprep.subr.mxu0 0.0
    %227 = vmatpush1.msra.mxu0 0.0
    %228 = vmatprep.subr.mxu0 0.0
    %229 = vmatpush1.msra.mxu0 0.0
    %230 = vmatprep.subr.mxu0 0.0
    %231 = vmatpush1.msra.mxu0 0.0
    %232 = vmatprep.mubr.f32.mxu0 0.0
    %233 = vmatmul.mubr.f32.gmra.mrb[0].mxu0 %v146
    %v234 = vpop.f32.mrb[0].mxu0
    %v235 = vadd.f32 %v167, %v234
    %v236 = vpop.f32.mrb[0].mxu0
    %237 = vdwg.mxu0
    %v238 = vmax.f32 %v235, 0.0
    %v239 = vld [vmem:[#allocation5 + $0x138] sm:$0xff]
    %v240 = vld [vmem:[#allocation5 + $0x140] sm:$0xff]
    %v241 = vld [vmem:[#allocation5 + $0x148] sm:$0xff]
    %v242 = vld [vmem:[#allocation5 + $0x150] sm:$0xff]
    %v243 = vld [vmem:[#allocation5 + $0x158] sm:$0xff]
    %v244 = vld [vmem:[#allocation5 + $0x160] sm:$0xff]
    %v245 = vld [vmem:[#allocation5 + $0x168] sm:$0xff]
    %v246 = vld [vmem:[#allocation5 + $0x170] sm:$0xff]
    %v247 = vld [vmem:[#allocation5 + $0x178] sm:$0xff]
    %v248 = vld [vmem:[#allocation5 + $0x180] sm:$0xff]
    %v249 = vld [vmem:[#allocation5 + $0x188] sm:$0xff]
    %v250 = vld [vmem:[#allocation5 + $0x190] sm:$0xff]
    %v251 = vld [vmem:[#allocation5 + $0x198] sm:$0xff]
    %v252 = vld [vmem:[#allocation5 + $0x1a0] sm:$0xff]
    %v253 = vld [vmem:[#allocation5 + $0x1a8] sm:$0xff]
    %v254 = vld [vmem:[#allocation5 + $0x1b0] sm:$0xff]
    %v255 = vld [vmem:[#allocation5 + $0x1b8] sm:$0x1]
    %v256 = vlaneseq
    %v257 = vshrl.u32 %v256, 7
    %v258 = vsub.s32 0, %v257
    %v259 = vrot.slane %v255, %v258
    %260 = vmatprep.subr.mxu0 0.0
    %261 = vmatpush1.msra.mxu0 %v239
    %262 = vmatprep.subr.mxu0 0.0
    %263 = vmatpush1.msra.mxu0 %v240
    %264 = vmatprep.subr.mxu0 0.0
    %265 = vmatpush1.msra.mxu0 %v241
    %266 = vmatprep.subr.mxu0 0.0
    %267 = vmatpush1.msra.mxu0 %v242
    %268 = vmatprep.subr.mxu0 0.0
    %269 = vmatpush1.msra.mxu0 %v243
    %270 = vmatprep.subr.mxu0 0.0
    %271 = vmatpush1.msra.mxu0 %v244
    %272 = vmatprep.subr.mxu0 0.0
    %273 = vmatpush1.msra.mxu0 %v245
    %274 = vmatprep.subr.mxu0 0.0
    %275 = vmatpush1.msra.mxu0 %v246
    %276 = vmatprep.subr.mxu0 0.0
    %277 = vmatpush1.msra.mxu0 %v247
    %278 = vmatprep.subr.mxu0 0.0
    %279 = vmatpush1.msra.mxu0 %v248
    %280 = vmatprep.subr.mxu0 0.0
    %281 = vmatpush1.msra.mxu0 %v249
    %282 = vmatprep.subr.mxu0 0.0
    %283 = vmatpush1.msra.mxu0 %v250
    %284 = vmatprep.subr.mxu0 0.0
    %285 = vmatpush1.msra.mxu0 %v251
    %286 = vmatprep.subr.mxu0 0.0
    %287 = vmatpush1.msra.mxu0 %v252
    %288 = vmatprep.subr.mxu0 0.0
    %289 = vmatpush1.msra.mxu0 %v253
    %290 = vmatprep.subr.mxu0 0.0
    %291 = vmatpush1.msra.mxu0 %v254
    %292 = vmatprep.subr.mxu0 0.0
    %293 = vmatpush1.msra.mxu0 0.0
    %294 = vmatprep.subr.mxu0 0.0
    %295 = vmatpush1.msra.mxu0 0.0
    %296 = vmatprep.subr.mxu0 0.0
    %297 = vmatpush1.msra.mxu0 0.0
    %298 = vmatprep.subr.mxu0 0.0
    %299 = vmatpush1.msra.mxu0 0.0
    %300 = vmatprep.subr.mxu0 0.0
    %301 = vmatpush1.msra.mxu0 0.0
    %302 = vmatprep.subr.mxu0 0.0
    %303 = vmatpush1.msra.mxu0 0.0
    %304 = vmatprep.subr.mxu0 0.0
    %305 = vmatpush1.msra.mxu0 0.0
    %306 = vmatprep.subr.mxu0 0.0
    %307 = vmatpush1.msra.mxu0 0.0
    %308 = vmatprep.subr.mxu0 0.0
    %309 = vmatpush1.msra.mxu0 0.0
    %310 = vmatprep.subr.mxu0 0.0
    %311 = vmatpush1.msra.mxu0 0.0
    %312 = vmatprep.subr.mxu0 0.0
    %313 = vmatpush1.msra.mxu0 0.0
    %314 = vmatprep.subr.mxu0 0.0
    %315 = vmatpush1.msra.mxu0 0.0
    %316 = vmatprep.subr.mxu0 0.0
    %317 = vmatpush1.msra.mxu0 0.0
    %318 = vmatprep.subr.mxu0 0.0
    %319 = vmatpush1.msra.mxu0 0.0
    %320 = vmatprep.subr.mxu0 0.0
    %321 = vmatpush1.msra.mxu0 0.0
    %322 = vmatprep.subr.mxu0 0.0
    %323 = vmatpush1.msra.mxu0 0.0
    %324 = vmatprep.mubr.f32.mxu0 0.0
    %325 = vmatmul.mubr.f32.gmra.mrb[0].mxu0 %v238
    %v326 = vpop.f32.mrb[0].mxu0
    %v327 = vadd.f32 %v259, %v326
    %v328 = vpop.f32.mrb[0].mxu0
    %329 = vdwg.mxu0
    %v330 = vmax.f32 %v327, 0.0
    %v331 = vld [vmem:[#allocation5 + $0x1c0] sm:$0xff]
    %v332 = vld [vmem:[#allocation5 + $0x1c8] sm:$0xff]
    %v333 = vld [vmem:[#allocation5 + $0x1d0] sm:$0xff]
    %v334 = vld [vmem:[#allocation5 + $0x1d8] sm:$0xff]
    %v335 = vld [vmem:[#allocation5 + $0x1e0] sm:$0xff]
    %v336 = vld [vmem:[#allocation5 + $0x1e8] sm:$0xff]
    %v337 = vld [vmem:[#allocation5 + $0x1f0] sm:$0xff]
    %v338 = vld [vmem:[#allocation5 + $0x1f8] sm:$0xff]
    %v339 = vld [vmem:[#allocation5 + $0x200] sm:$0xff]
    %v340 = vld [vmem:[#allocation5 + $0x208] sm:$0xff]
    %v341 = vld [vmem:[#allocation5 + $0x210] sm:$0xff]
    %v342 = vld [vmem:[#allocation5 + $0x218] sm:$0xff]
    %v343 = vld [vmem:[#allocation5 + $0x220] sm:$0xff]
    %v344 = vld [vmem:[#allocation5 + $0x228] sm:$0xff]
    %v345 = vld [vmem:[#allocation5 + $0x230] sm:$0xff]
    %v346 = vld [vmem:[#allocation5 + $0x238] sm:$0xff]
    %v347 = vld [vmem:[#allocation5 + $0x240] sm:$0x1]
    %v348 = vlaneseq
    %v349 = vshrl.u32 %v348, 7
    %v350 = vsub.s32 0, %v349
    %v351 = vrot.slane %v347, %v350
    %352 = vmatprep.subr.mxu0 0.0
    %353 = vmatpush1.msra.mxu0 %v331
    %354 = vmatprep.subr.mxu0 0.0
    %355 = vmatpush1.msra.mxu0 %v332
    %356 = vmatprep.subr.mxu0 0.0
    %357 = vmatpush1.msra.mxu0 %v333
    %358 = vmatprep.subr.mxu0 0.0
    %359 = vmatpush1.msra.mxu0 %v334
    %360 = vmatprep.subr.mxu0 0.0
    %361 = vmatpush1.msra.mxu0 %v335
    %362 = vmatprep.subr.mxu0 0.0
    %363 = vmatpush1.msra.mxu0 %v336
    %364 = vmatprep.subr.mxu0 0.0
    %365 = vmatpush1.msra.mxu0 %v337
    %366 = vmatprep.subr.mxu0 0.0
    %367 = vmatpush1.msra.mxu0 %v338
    %368 = vmatprep.subr.mxu0 0.0
    %369 = vmatpush1.msra.mxu0 %v339
    %370 = vmatprep.subr.mxu0 0.0
    %371 = vmatpush1.msra.mxu0 %v340
    %372 = vmatprep.subr.mxu0 0.0
    %373 = vmatpush1.msra.mxu0 %v341
    %374 = vmatprep.subr.mxu0 0.0
    %375 = vmatpush1.msra.mxu0 %v342
    %376 = vmatprep.subr.mxu0 0.0
    %377 = vmatpush1.msra.mxu0 %v343
    %378 = vmatprep.subr.mxu0 0.0
    %379 = vmatpush1.msra.mxu0 %v344
    %380 = vmatprep.subr.mxu0 0.0
    %381 = vmatpush1.msra.mxu0 %v345
    %382 = vmatprep.subr.mxu0 0.0
    %383 = vmatpush1.msra.mxu0 %v346
    %384 = vmatprep.subr.mxu0 0.0
    %385 = vmatpush1.msra.mxu0 0.0
    %386 = vmatprep.subr.mxu0 0.0
    %387 = vmatpush1.msra.mxu0 0.0
    %388 = vmatprep.subr.mxu0 0.0
    %389 = vmatpush1.msra.mxu0 0.0
    %390 = vmatprep.subr.mxu0 0.0
    %391 = vmatpush1.msra.mxu0 0.0
    %392 = vmatprep.subr.mxu0 0.0
    %393 = vmatpush1.msra.mxu0 0.0
    %394 = vmatprep.subr.mxu0 0.0
    %395 = vmatpush1.msra.mxu0 0.0
    %396 = vmatprep.subr.mxu0 0.0
    %397 = vmatpush1.msra.mxu0 0.0
    %398 = vmatprep.subr.mxu0 0.0
    %399 = vmatpush1.msra.mxu0 0.0
    %400 = vmatprep.subr.mxu0 0.0
    %401 = vmatpush1.msra.mxu0 0.0
    %402 = vmatprep.subr.mxu0 0.0
    %403 = vmatpush1.msra.mxu0 0.0
    %404 = vmatprep.subr.mxu0 0.0
    %405 = vmatpush1.msra.mxu0 0.0
    %406 = vmatprep.subr.mxu0 0.0
    %407 = vmatpush1.msra.mxu0 0.0
    %408 = vmatprep.subr.mxu0 0.0
    %409 = vmatpush1.msra.mxu0 0.0
    %410 = vmatprep.subr.mxu0 0.0
    %411 = vmatpush1.msra.mxu0 0.0
    %412 = vmatprep.subr.mxu0 0.0
    %413 = vmatpush1.msra.mxu0 0.0
    %414 = vmatprep.subr.mxu0 0.0
    %415 = vmatpush1.msra.mxu0 0.0
    %416 = vmatprep.mubr.f32.mxu0 0.0
    %417 = vmatmul.mubr.f32.gmra.mrb[0].mxu0 %v330
    %v418 = vpop.f32.mrb[0].mxu0
    %v419 = vadd.f32 %v351, %v418
    %v420 = vpop.f32.mrb[0].mxu0
    %421 = vdwg.mxu0
    %v422 = vsub.f32 0.0, %v419
    %v423 = vmul.f32 %v422, 1.442695
    %v424 = vpow.pop %v423
    %v425 = vadd.f32 %v424, 1.0
    %v426 = vrcp.pop %v425
    %v427 = vmul.f32 1.0, %v426
    %429 = vrot.lane.b32.xlu0 %v427, 47
    %v430 = vpop.permute.xlu0 %429
    %vm432 = vcmask 7168
    %433 = vst.msk [vmem:[%s3] sm:$0xff] %vm432, %v430
    %v434 = vmax.f32 %v419, 0.0
    %v435 = vld [vmem:[#allocation5 + $0x248] sm:$0x1]
    %v436 = vld [vmem:[#allocation5 + $0x258] sm:$0x1]
    %v437 = vlaneseq
    %v438 = vshrl.u32 %v437, 7
    %v439 = vsub.s32 0, %v438
    %v440 = vrot.slane %v435, %v439
    %v441 = vmul.f32 %v434, %v440
    %v442 = vlaneseq
    %v443 = vshrl.u32 %v442, 7
    %v444 = vsub.s32 0, %v443
    %v445 = vrot.slane %v436, %v444
    %v446 = vadd.f32 %v441, %v445
    %v447 = vmax.f32 %v446, 0.0
    %v448 = vld [vmem:[#allocation5 + $0x249] sm:$0x1]
    %v449 = vld [vmem:[#allocation5 + $0x259] sm:$0x1]
    %v450 = vlaneseq
    %v451 = vshrl.u32 %v450, 7
    %v452 = vsub.s32 0, %v451
    %v453 = vrot.slane %v448, %v452
    %v454 = vmul.f32 %v434, %v453
    %v455 = vlaneseq
    %v456 = vshrl.u32 %v455, 7
    %v457 = vsub.s32 0, %v456
    %v458 = vrot.slane %v449, %v457
    %v459 = vadd.f32 %v454, %v458
    %v460 = vmax.f32 %v459, 0.0
    %v461 = vmax.f32 %v447, %v460
    %v462 = vld [vmem:[#allocation5 + $0x24a] sm:$0x1]
    %v463 = vld [vmem:[#allocation5 + $0x25a] sm:$0x1]
    %v464 = vlaneseq
    %v465 = vshrl.u32 %v464, 7
    %v466 = vsub.s32 0, %v465
    %v467 = vrot.slane %v462, %v466
    %v468 = vmul.f32 %v434, %v467
    %v469 = vlaneseq
    %v470 = vshrl.u32 %v469, 7
    %v471 = vsub.s32 0, %v470
    %v472 = vrot.slane %v463, %v471
    %v473 = vadd.f32 %v468, %v472
    %v474 = vmax.f32 %v473, 0.0
    %v475 = vmax.f32 %v461, %v474
    %v476 = vld [vmem:[#allocation5 + $0x24b] sm:$0x1]
    %v477 = vld [vmem:[#allocation5 + $0x25b] sm:$0x1]
    %v478 = vlaneseq
    %v479 = vshrl.u32 %v478, 7
    %v480 = vsub.s32 0, %v479
    %v481 = vrot.slane %v476, %v480
    %v482 = vmul.f32 %v434, %v481
    %v483 = vlaneseq
    %v484 = vshrl.u32 %v483, 7
    %v485 = vsub.s32 0, %v484
    %v486 = vrot.slane %v477, %v485
    %v487 = vadd.f32 %v482, %v486
    %v488 = vmax.f32 %v487, 0.0
    %v489 = vmax.f32 %v475, %v488
    %v490 = vld [vmem:[#allocation5 + $0x24c] sm:$0x1]
    %v491 = vld [vmem:[#allocation5 + $0x25c] sm:$0x1]
    %v492 = vlaneseq
    %v493 = vshrl.u32 %v492, 7
    %v494 = vsub.s32 0, %v493
    %v495 = vrot.slane %v490, %v494
    %v496 = vmul.f32 %v434, %v495
    %v497 = vlaneseq
    %v498 = vshrl.u32 %v497, 7
    %v499 = vsub.s32 0, %v498
    %v500 = vrot.slane %v491, %v499
    %v501 = vadd.f32 %v496, %v500
    %v502 = vmax.f32 %v501, 0.0
    %v503 = vmax.f32 %v489, %v502
    %v504 = vld [vmem:[#allocation5 + $0x24d] sm:$0x1]
    %v505 = vld [vmem:[#allocation5 + $0x25d] sm:$0x1]
    %v506 = vlaneseq
    %v507 = vshrl.u32 %v506, 7
    %v508 = vsub.s32 0, %v507
    %v509 = vrot.slane %v504, %v508
    %v510 = vmul.f32 %v434, %v509
    %v511 = vlaneseq
    %v512 = vshrl.u32 %v511, 7
    %v513 = vsub.s32 0, %v512
    %v514 = vrot.slane %v505, %v513
    %v515 = vadd.f32 %v510, %v514
    %v516 = vmax.f32 %v515, 0.0
    %v517 = vmax.f32 %v503, %v516
    %v518 = vld [vmem:[#allocation5 + $0x24e] sm:$0x1]
    %v519 = vld [vmem:[#allocation5 + $0x25e] sm:$0x1]
    %v520 = vlaneseq
    %v521 = vshrl.u32 %v520, 7
    %v522 = vsub.s32 0, %v521
    %v523 = vrot.slane %v518, %v522
    %v524 = vmul.f32 %v434, %v523
    %v525 = vlaneseq
    %v526 = vshrl.u32 %v525, 7
    %v527 = vsub.s32 0, %v526
    %v528 = vrot.slane %v519, %v527
    %v529 = vadd.f32 %v524, %v528
    %v530 = vmax.f32 %v529, 0.0
    %v531 = vmax.f32 %v517, %v530
    %v532 = vld [vmem:[#allocation5 + $0x24f] sm:$0x1]
    %v533 = vld [vmem:[#allocation5 + $0x25f] sm:$0x1]
    %v534 = vlaneseq
    %v535 = vshrl.u32 %v534, 7
    %v536 = vsub.s32 0, %v535
    %v537 = vrot.slane %v532, %v536
    %v538 = vmul.f32 %v434, %v537
    %v539 = vlaneseq
    %v540 = vshrl.u32 %v539, 7
    %v541 = vsub.s32 0, %v540
    %v542 = vrot.slane %v533, %v541
    %v543 = vadd.f32 %v538, %v542
    %v544 = vmax.f32 %v543, 0.0
    %v545 = vmax.f32 %v531, %v544
    %v546 = vld [vmem:[#allocation5 + $0x250] sm:$0x1]
    %v547 = vld [vmem:[#allocation5 + $0x260] sm:$0x1]
    %v548 = vlaneseq
    %v549 = vshrl.u32 %v548, 7
    %v550 = vsub.s32 0, %v549
    %v551 = vrot.slane %v546, %v550
    %v552 = vmul.f32 %v434, %v551
    %v553 = vlaneseq
    %v554 = vshrl.u32 %v553, 7
    %v555 = vsub.s32 0, %v554
    %v556 = vrot.slane %v547, %v555
    %v557 = vadd.f32 %v552, %v556
    %v558 = vmax.f32 %v557, 0.0
    %v559 = vmax.f32 %v545, %v558
    %v560 = vsub.f32 %v447, %v559
    %v561 = vmul.f32 %v560, 1.442695
    %v562 = vpow.pop %v561
    %v563 = vsub.f32 %v460, %v559
    %v564 = vmul.f32 %v563, 1.442695
    %v565 = vpow.pop %v564
    %v566 = vadd.f32 %v562, %v565
    %v567 = vsub.f32 %v474, %v559
    %v568 = vmul.f32 %v567, 1.442695
    %v569 = vpow.pop %v568
    %v570 = vadd.f32 %v566, %v569
    %v571 = vsub.f32 %v488, %v559
    %v572 = vmul.f32 %v571, 1.442695
    %v573 = vpow.pop %v572
    %v574 = vadd.f32 %v570, %v573
    %v575 = vsub.f32 %v502, %v559
    %v576 = vmul.f32 %v575, 1.442695
    %v577 = vpow.pop %v576
    %v578 = vadd.f32 %v574, %v577
    %v579 = vsub.f32 %v516, %v559
    %v580 = vmul.f32 %v579, 1.442695
    %v581 = vpow.pop %v580
    %v582 = vadd.f32 %v578, %v581
    %v583 = vsub.f32 %v530, %v559
    %v584 = vmul.f32 %v583, 1.442695
    %v585 = vpow.pop %v584
    %v586 = vadd.f32 %v582, %v585
    %v587 = vsub.f32 %v544, %v559
    %v588 = vmul.f32 %v587, 1.442695
    %v589 = vpow.pop %v588
    %v590 = vadd.f32 %v586, %v589
    %v591 = vsub.f32 %v558, %v559
    %v592 = vmul.f32 %v591, 1.442695
    %v593 = vpow.pop %v592
    %v594 = vadd.f32 %v590, %v593
    %v595 = vlog2.pop %v594
    %v596 = vmul.f32 %v595, 0.6931472
    %v597 = vadd.f32 %v559, %v596
    %v598 = vsub.f32 %v447, %v597
    %vm599 = vcmask 662528
    %600 = vst.msk [vmem:[#allocation7] sm:$0xff] %vm599, %v598
    %v601 = vsub.f32 %v460, %v597
    %s602 = scalar_lea.vmem [#allocation7], 8
    %603 = vst.msk [vmem:[%s602] sm:$0xff] %vm599, %v601
    %v604 = vsub.f32 %v474, %v597
    %s605 = scalar_lea.vmem [#allocation7], 16
    %606 = vst.msk [vmem:[%s605] sm:$0xff] %vm599, %v604
    %v607 = vsub.f32 %v488, %v597
    %s608 = scalar_lea.vmem [#allocation7], 24
    %609 = vst.msk [vmem:[%s608] sm:$0xff] %vm599, %v607
    %v610 = vsub.f32 %v502, %v597
    %s611 = scalar_lea.vmem [#allocation7], 32
    %612 = vst.msk [vmem:[%s611] sm:$0xff] %vm599, %v610
    %v613 = vsub.f32 %v516, %v597
    %s614 = scalar_lea.vmem [#allocation7], 40
    %615 = vst.msk [vmem:[%s614] sm:$0xff] %vm599, %v613
    %v616 = vsub.f32 %v530, %v597
    %s617 = scalar_lea.vmem [#allocation7], 48
    %618 = vst.msk [vmem:[%s617] sm:$0xff] %vm599, %v616
    %v619 = vsub.f32 %v544, %v597
    %s620 = scalar_lea.vmem [#allocation7], 56
    %621 = vst.msk [vmem:[%s620] sm:$0xff] %vm599, %v619
    %v622 = vsub.f32 %v558, %v597
    %s623 = scalar_lea.vmem [#allocation7], 64
    %624 = vst.msk [vmem:[%s623] sm:$0xff] %vm599, %v622
    // Predicated region
    $region18: #{tpu_custom_call.1} parent=1 // pred_check
      _
    $region19: #{tpu_custom_call.1} parent=1 // pred_check_branch
      %626 = sbr.rel (0) target = $region21
    $region20: #{tpu_custom_call.1} parent=1 // pred_region
      %s628 = ssub.s32 1152, 1152
      %629 = vsyncadd [#allocation4], %s628
      %s630 = sshll.u32 [#allocation7], 4
      %s631 = int_to_ptr.vmem [resolvable:$true] %s630
      %636 = dma.vmem_to_hbm [thread:$0]  %s631, 1152, %s2, [#allocation4], 128, 128, 8
    $region21: #{tpu_custom_call.1} parent=1 // pred_fallthru
      _
    // Predicated region
    $region22: #{tpu_custom_call.1} parent=1 // pred_check
      _
    $region23: #{tpu_custom_call.1} parent=1 // pred_check_branch
      %638 = sbr.rel (0) target = $region25
    $region24: #{tpu_custom_call.1} parent=1 // pred_region
      _
    $region25: #{tpu_custom_call.1} parent=1 // pred_fallthru
      _
    // Predicated region
    $region26: #{tpu_custom_call.1} parent=1 // pred_check
      _
    $region27: #{tpu_custom_call.1} parent=1 // pred_check_branch
      %640 = sbr.rel (0) target = $region29
    $region28: #{tpu_custom_call.1} parent=1 // pred_region
      %641 = dma.done [#allocation4], 1152
    $region29: #{tpu_custom_call.1} parent=1 // pred_fallthru
      _
    // Predicated region
    $region30: #{tpu_custom_call.1} parent=1 // pred_check
      _
    $region31: #{tpu_custom_call.1} parent=1 // pred_check_branch
      %643 = sbr.rel (0) target = $region33
    $region32: #{tpu_custom_call.1} parent=1 // pred_region
      _
    $region33: #{tpu_custom_call.1} parent=1 // pred_fallthru
      _
    %644 = vsyncpa [#allocation3], 1
    %645 = vsyncpa [#allocation6], 1
    %646 = vsyncpa [#allocation4], 1

</llo_original>
